<compile_context>
chip_gen: v6e
topology: v6e:2x2x1
jax: 0.10.0
libtpu: 0.0.40
codegen_flags: <defaults>
</compile_context>

<pallas_src>
import functools

import jax
import jax.numpy as jnp
from jax import lax
from jax.experimental import pallas as pl
from jax.experimental.pallas import tpu as pltpu

_LANE = 128
_SUBLANE = 8
_MAX_BATCH_TILE = 512


def _round_up(x, m):
    return (x + m - 1) // m * m


def _keep_mask(shape, seed_ref, layer_salt, tile_rows, threshold):
    """Counter-based splitmix32 hash -> uint32 -> integer keep decision."""
    tile = pl.program_id(0).astype(jnp.uint32)
    rows = lax.broadcasted_iota(jnp.int32, shape, 0).astype(jnp.uint32)
    cols = lax.broadcasted_iota(jnp.int32, shape, 1).astype(jnp.uint32)
    # Globally unique per-element counter (distinct across batch tiles).
    ctr = (rows + tile * jnp.uint32(tile_rows)) * jnp.uint32(shape[1]) + cols
    x = ctr ^ (seed_ref[0].astype(jnp.uint32) + jnp.uint32(layer_salt))
    # splitmix32 finalizer
    x = (x ^ (x >> 16)) * jnp.uint32(0x7FEB352D)
    x = (x ^ (x >> 15)) * jnp.uint32(0x846CA68B)
    x = x ^ (x >> 16)
    return x >= jnp.uint32(threshold)  # P(keep) = 1 - p


def _dropout(h, p, seed_ref, layer_salt, tile_rows):
    """Inverted dropout in f32; no-op when p<=0, all-zeros when p>=1."""
    if p <= 0.0:
        return h
    if p >= 1.0:  # torch.nn.Dropout(p=1) outputs zeros
        return jnp.zeros_like(h)
    threshold = min(int(round(p * 4294967296.0)), 4294967295)
    keep = _keep_mask(h.shape, seed_ref, layer_salt, tile_rows, threshold)
    return jnp.where(keep, h * jnp.float32(1.0 / (1.0 - p)), 0.0)


def _mlp_kernel(seed_ref, x_ref, w1_ref, b1_ref, w2_ref, b2_ref,
                w3_ref, b3_ref, o_ref, *, p, tile_rows):
    # fc1 -> relu -> dropout1  (bf16 operands on the MXU, f32 accumulation)
    h = jnp.dot(x_ref[...], w1_ref[...], preferred_element_type=jnp.float32)
    h = jnp.maximum(h + b1_ref[...], 0.0)
    h = _dropout(h, p, seed_ref, 0x243F6A88, tile_rows)

    # fc2 -> relu -> dropout2
    h = jnp.dot(h.astype(jnp.bfloat16), w2_ref[...],
                preferred_element_type=jnp.float32)
    h = jnp.maximum(h + b2_ref[...], 0.0)
    h = _dropout(h, p, seed_ref, 0x85A308D3, tile_rows)

    # fc3 -> softmax over features (torch softmax(dim=1) on a 2-D input).
    # Padded columns carry a -1e30 bias, so exp() underflows to exactly 0 and
    # they do not perturb the denominator.
    logits = jnp.dot(h.astype(jnp.bfloat16), w3_ref[...],
                     preferred_element_type=jnp.float32) + b3_ref[...]
    m = jnp.max(logits, axis=-1, keepdims=True)
    e = jnp.exp(logits - m)
    denom = jnp.sum(e, axis=-1, keepdims=True)
    o_ref[...] = (e / denom).astype(o_ref.dtype)


def dropout_three_layer_perceptron(x, params, *, dropout_prob, seed,
                                   training=True):
    """Forward pass matching DropoutThreeLayerPerceptron.forward.

    x:       (batch, input_size) float32
    params:  (w1, b1, w2, b2, w3, b3) with wK shaped (in, out), bK shaped (1, out)
    """
    w1, b1, w2, b2, w3, b3 = params
    batch, input_size = x.shape
    hidden_size = w1.shape[1]
    output_size = w3.shape[1]
    p = float(dropout_prob) if training else 0.0

    # Lane-dense / 128-aligned padded shapes.
    din = _round_up(input_size, _LANE)
    dh = _round_up(hidden_size, _LANE)
    dout = _round_up(output_size, _LANE)

    # Batch tiling: big tiles for pipelining, padded so the grid is exact.
    tb = min(_MAX_BATCH_TILE, _round_up(batch, _SUBLANE))
    pb = _round_up(batch, tb)

    # Pad (zeros are exact: zero rows/cols contribute nothing) and cast the
    # matmul operands to bf16 once, outside the grid loop.
    xp = jnp.zeros((pb, din), jnp.bfloat16)
    xp = xp.at[:batch, :input_size].set(x.astype(jnp.bfloat16))
    w1p = jnp.zeros((din, dh), jnp.bfloat16)
    w1p = w1p.at[:input_size, :hidden_size].set(w1.astype(jnp.bfloat16))
    w2p = jnp.zeros((dh, dh), jnp.bfloat16)
    w2p = w2p.at[:hidden_size, :hidden_size].set(w2.astype(jnp.bfloat16))
    w3p = jnp.zeros((dh, dout), jnp.bfloat16)
    w3p = w3p.at[:hidden_size, :output_size].set(w3.astype(jnp.bfloat16))
    b1p = jnp.zeros((1, dh), jnp.float32).at[:, :hidden_size].set(
        b1.astype(jnp.float32))
    b2p = jnp.zeros((1, dh), jnp.float32).at[:, :hidden_size].set(
        b2.astype(jnp.float32))
    # Padded logit columns masked out of the softmax via a huge negative bias.
    b3p = jnp.full((1, dout), -1e30, jnp.float32).at[:, :output_size].set(
        b3.astype(jnp.float32))

    seed_arr = jnp.asarray([seed], dtype=jnp.int32)
    kernel = functools.partial(_mlp_kernel, p=p, tile_rows=tb)

    out = pl.pallas_call(
        kernel,
        out_shape=jax.ShapeDtypeStruct((pb, dout), jnp.float32),
        grid=(pb // tb,),
        in_specs=[
            pl.BlockSpec(memory_space=pltpu.MemorySpace.SMEM),   # seed
            pl.BlockSpec((tb, din), lambda i: (i, 0)),           # x tile
            pl.BlockSpec((din, dh), lambda i: (0, 0)),           # w1 (resident)
            pl.BlockSpec((1, dh), lambda i: (0, 0)),             # b1
            pl.BlockSpec((dh, dh), lambda i: (0, 0)),            # w2 (resident)
            pl.BlockSpec((1, dh), lambda i: (0, 0)),             # b2
            pl.BlockSpec((dh, dout), lambda i: (0, 0)),          # w3 (resident)
            pl.BlockSpec((1, dout), lambda i: (0, 0)),           # b3
        ],
        out_specs=pl.BlockSpec((tb, dout), lambda i: (i, 0)),
        compiler_params=pltpu.CompilerParams(
            dimension_semantics=("parallel",),
            vmem_limit_bytes=64 * 1024 * 1024,
        ),
    )(seed_arr, xp, w1p, b1p, w2p, b2p, w3p, b3p)

    return out[:batch, :output_size]


def init_params(key, input_size, hidden_size, output_size):
    """Deterministic init mimicking nn.Linear (uniform +/- 1/sqrt(fan_in)).

    Weights are stored transposed, i.e. shape (in, out)."""
    ks = jax.random.split(key, 6)

    def linear(kw, kb, fan_in, fan_out):
        bound = 1.0 / jnp.sqrt(fan_in)
        w = jax.random.uniform(kw, (fan_in, fan_out), jnp.float32, -bound, bound)
        b = jax.random.uniform(kb, (1, fan_out), jnp.float32, -bound, bound)
        return w, b

    w1, b1 = linear(ks[0], ks[1], input_size, hidden_size)
    w2, b2 = linear(ks[2], ks[3], hidden_size, hidden_size)
    w3, b3 = linear(ks[4], ks[5], hidden_size, output_size)
    return (w1, b1, w2, b2, w3, b3)


if __name__ == "__main__":
    input_size = 16
    hidden_size = 32
    output_size = 8
    batch = 8
    dropout_prob = 0.25

    key = jax.random.PRNGKey(0)
    k_x, k_p = jax.random.split(key)
    x = jax.random.normal(k_x, (batch, input_size), dtype=jnp.float32)
    params = init_params(k_p, input_size, hidden_size, output_size)

    out = dropout_three_layer_perceptron(
        x, params, dropout_prob=dropout_prob, seed=1234, training=True)
    out = jax.block_until_ready(out)

    # sanity: shape, finiteness, softmax rows sum to 1
    assert out.shape == (batch, output_size)
    assert bool(jnp.all(jnp.isfinite(out)))
    assert jnp.allclose(jnp.sum(out, axis=1), 1.0, atol=1e-5)
    print("KERNEL_OK")
</pallas_src>

<mosaic_0001>
module attributes {stable_mosaic.version = 11 : i64} {
  func.func @_mlp_kernel(%arg0: i32, %arg1: memref<1xi32, #tpu.memory_space<smem>>, %arg2: memref<8x128xbf16, #tpu.memory_space<vmem>>, %arg3: memref<128x128xbf16, #tpu.memory_space<vmem>>, %arg4: memref<1x128xf32, #tpu.memory_space<vmem>>, %arg5: memref<128x128xbf16, #tpu.memory_space<vmem>>, %arg6: memref<1x128xf32, #tpu.memory_space<vmem>>, %arg7: memref<128x128xbf16, #tpu.memory_space<vmem>>, %arg8: memref<1x128xf32, #tpu.memory_space<vmem>>, %arg9: memref<8x128xf32, #tpu.memory_space<vmem>>) attributes {dimension_semantics = [#tpu.dimension_semantics<parallel>], iteration_bounds = array<i64: 1>, scalar_prefetch = 0 : i64, scratch_operands = 0 : i64, tpu.core_type = #tpu.core_type<tc>, window_params = [{transform_indices = @transform_0, window_bounds = array<i64: 1>}, {transform_indices = @transform_1, window_bounds = array<i64: 8, 128>}, {pipeline_mode = #tpu.pipeline_mode<synchronous>, transform_indices = @transform_2, window_bounds = array<i64: 128, 128>}, {pipeline_mode = #tpu.pipeline_mode<synchronous>, transform_indices = @transform_3, window_bounds = array<i64: 1, 128>}, {pipeline_mode = #tpu.pipeline_mode<synchronous>, transform_indices = @transform_4, window_bounds = array<i64: 128, 128>}, {pipeline_mode = #tpu.pipeline_mode<synchronous>, transform_indices = @transform_5, window_bounds = array<i64: 1, 128>}, {pipeline_mode = #tpu.pipeline_mode<synchronous>, transform_indices = @transform_6, window_bounds = array<i64: 128, 128>}, {pipeline_mode = #tpu.pipeline_mode<synchronous>, transform_indices = @transform_7, window_bounds = array<i64: 1, 128>}, {transform_indices = @transform_8, window_bounds = array<i64: 8, 128>}]} {
    %c0 = arith.constant 0 : index
    %c0_0 = arith.constant 0 : index
    %0 = vector.load %arg2[%c0, %c0_0] : memref<8x128xbf16, #tpu.memory_space<vmem>>, vector<8x128xbf16>
    %c0_1 = arith.constant 0 : index
    %c0_2 = arith.constant 0 : index
    %1 = vector.load %arg3[%c0_1, %c0_2] : memref<128x128xbf16, #tpu.memory_space<vmem>>, vector<128x128xbf16>
    %cst = arith.constant dense<0.000000e+00> : vector<8x128xf32>
    %2 = tpu.matmul %0, %1, %cst {dimension_numbers = #tpu.dot_dimension_numbers<[1], [0], [0], [1], [0, 0, 1, 1], [], []>} : vector<8x128xbf16>, vector<128x128xbf16>, vector<8x128xf32> -> vector<8x128xf32>
    %c0_3 = arith.constant 0 : index
    %c0_4 = arith.constant 0 : index
    %3 = vector.load %arg4[%c0_3, %c0_4] : memref<1x128xf32, #tpu.memory_space<vmem>>, vector<1x128xf32>
    %4 = vector.broadcast %3 : vector<1x128xf32> to vector<8x128xf32>
    %5 = arith.addf %2, %4 : vector<8x128xf32>
    %cst_5 = arith.constant 0.000000e+00 : f32
    %6 = vector.broadcast %cst_5 : f32 to vector<8x128xf32>
    %7 = arith.maximumf %5, %6 : vector<8x128xf32>
    %8 = tpu.iota {dimensions = array<i32: 0>} : vector<8x128xi32>
    %9 = tpu.iota {dimensions = array<i32: 1>} : vector<8x128xi32>
    %c8_i32 = arith.constant 8 : i32
    %10 = arith.muli %arg0, %c8_i32 : i32
    %11 = vector.broadcast %10 : i32 to vector<8x128xi32>
    %12 = arith.addi %8, %11 : vector<8x128xi32>
    %c128_i32 = arith.constant 128 : i32
    %13 = vector.broadcast %c128_i32 : i32 to vector<8x128xi32>
    %14 = arith.muli %12, %13 : vector<8x128xi32>
    %15 = arith.addi %14, %9 : vector<8x128xi32>
    %c0_6 = arith.constant 0 : index
    %16 = memref.load %arg1[%c0_6] : memref<1xi32, #tpu.memory_space<smem>>
    %c608135816_i32 = arith.constant 608135816 : i32
    %17 = arith.addi %16, %c608135816_i32 : i32
    %18 = vector.broadcast %17 : i32 to vector<8x128xi32>
    %19 = arith.xori %15, %18 : vector<8x128xi32>
    %c16_i32 = arith.constant 16 : i32
    %20 = vector.broadcast %c16_i32 : i32 to vector<8x128xi32>
    %21 = arith.shrui %19, %20 : vector<8x128xi32>
    %22 = arith.xori %19, %21 : vector<8x128xi32>
    %c2146121005_i32 = arith.constant 2146121005 : i32
    %23 = vector.broadcast %c2146121005_i32 : i32 to vector<8x128xi32>
    %24 = arith.muli %22, %23 : vector<8x128xi32>
    %c15_i32 = arith.constant 15 : i32
    %25 = vector.broadcast %c15_i32 : i32 to vector<8x128xi32>
    %26 = arith.shrui %24, %25 : vector<8x128xi32>
    %27 = arith.xori %24, %26 : vector<8x128xi32>
    %c-2073254261_i32 = arith.constant -2073254261 : i32
    %28 = vector.broadcast %c-2073254261_i32 : i32 to vector<8x128xi32>
    %29 = arith.muli %27, %28 : vector<8x128xi32>
    %c16_i32_7 = arith.constant 16 : i32
    %30 = vector.broadcast %c16_i32_7 : i32 to vector<8x128xi32>
    %31 = arith.shrui %29, %30 : vector<8x128xi32>
    %32 = arith.xori %29, %31 : vector<8x128xi32>
    %c1073741824_i32 = arith.constant 1073741824 : i32
    %33 = vector.broadcast %c1073741824_i32 : i32 to vector<8x128xi32>
    %34 = arith.cmpi uge, %32, %33 : vector<8x128xi32>
    %cst_8 = arith.constant 1.33333337 : f32
    %35 = vector.broadcast %cst_8 : f32 to vector<8x128xf32>
    %36 = arith.mulf %7, %35 : vector<8x128xf32>
    %cst_9 = arith.constant 0.000000e+00 : f32
    %37 = vector.broadcast %cst_9 : f32 to vector<8x128xf32>
    %38 = arith.select %34, %36, %37 : vector<8x128xi1>, vector<8x128xf32>
    %39 = arith.truncf %38 : vector<8x128xf32> to vector<8x128xbf16>
    %c0_10 = arith.constant 0 : index
    %c0_11 = arith.constant 0 : index
    %40 = vector.load %arg5[%c0_10, %c0_11] : memref<128x128xbf16, #tpu.memory_space<vmem>>, vector<128x128xbf16>
    %cst_12 = arith.constant dense<0.000000e+00> : vector<8x128xf32>
    %41 = tpu.matmul %39, %40, %cst_12 {dimension_numbers = #tpu.dot_dimension_numbers<[1], [0], [0], [1], [0, 0, 1, 1], [], []>} : vector<8x128xbf16>, vector<128x128xbf16>, vector<8x128xf32> -> vector<8x128xf32>
    %c0_13 = arith.constant 0 : index
    %c0_14 = arith.constant 0 : index
    %42 = vector.load %arg6[%c0_13, %c0_14] : memref<1x128xf32, #tpu.memory_space<vmem>>, vector<1x128xf32>
    %43 = vector.broadcast %42 : vector<1x128xf32> to vector<8x128xf32>
    %44 = arith.addf %41, %43 : vector<8x128xf32>
    %cst_15 = arith.constant 0.000000e+00 : f32
    %45 = vector.broadcast %cst_15 : f32 to vector<8x128xf32>
    %46 = arith.maximumf %44, %45 : vector<8x128xf32>
    %47 = tpu.iota {dimensions = array<i32: 0>} : vector<8x128xi32>
    %48 = tpu.iota {dimensions = array<i32: 1>} : vector<8x128xi32>
    %c8_i32_16 = arith.constant 8 : i32
    %49 = arith.muli %arg0, %c8_i32_16 : i32
    %50 = vector.broadcast %49 : i32 to vector<8x128xi32>
    %51 = arith.addi %47, %50 : vector<8x128xi32>
    %c128_i32_17 = arith.constant 128 : i32
    %52 = vector.broadcast %c128_i32_17 : i32 to vector<8x128xi32>
    %53 = arith.muli %51, %52 : vector<8x128xi32>
    %54 = arith.addi %53, %48 : vector<8x128xi32>
    %c0_18 = arith.constant 0 : index
    %55 = memref.load %arg1[%c0_18] : memref<1xi32, #tpu.memory_space<smem>>
    %c-2052912941_i32 = arith.constant -2052912941 : i32
    %56 = arith.addi %55, %c-2052912941_i32 : i32
    %57 = vector.broadcast %56 : i32 to vector<8x128xi32>
    %58 = arith.xori %54, %57 : vector<8x128xi32>
    %c16_i32_19 = arith.constant 16 : i32
    %59 = vector.broadcast %c16_i32_19 : i32 to vector<8x128xi32>
    %60 = arith.shrui %58, %59 : vector<8x128xi32>
    %61 = arith.xori %58, %60 : vector<8x128xi32>
    %c2146121005_i32_20 = arith.constant 2146121005 : i32
    %62 = vector.broadcast %c2146121005_i32_20 : i32 to vector<8x128xi32>
    %63 = arith.muli %61, %62 : vector<8x128xi32>
    %c15_i32_21 = arith.constant 15 : i32
    %64 = vector.broadcast %c15_i32_21 : i32 to vector<8x128xi32>
    %65 = arith.shrui %63, %64 : vector<8x128xi32>
    %66 = arith.xori %63, %65 : vector<8x128xi32>
    %c-2073254261_i32_22 = arith.constant -2073254261 : i32
    %67 = vector.broadcast %c-2073254261_i32_22 : i32 to vector<8x128xi32>
    %68 = arith.muli %66, %67 : vector<8x128xi32>
    %c16_i32_23 = arith.constant 16 : i32
    %69 = vector.broadcast %c16_i32_23 : i32 to vector<8x128xi32>
    %70 = arith.shrui %68, %69 : vector<8x128xi32>
    %71 = arith.xori %68, %70 : vector<8x128xi32>
    %c1073741824_i32_24 = arith.constant 1073741824 : i32
    %72 = vector.broadcast %c1073741824_i32_24 : i32 to vector<8x128xi32>
    %73 = arith.cmpi uge, %71, %72 : vector<8x128xi32>
    %cst_25 = arith.constant 1.33333337 : f32
    %74 = vector.broadcast %cst_25 : f32 to vector<8x128xf32>
    %75 = arith.mulf %46, %74 : vector<8x128xf32>
    %cst_26 = arith.constant 0.000000e+00 : f32
    %76 = vector.broadcast %cst_26 : f32 to vector<8x128xf32>
    %77 = arith.select %73, %75, %76 : vector<8x128xi1>, vector<8x128xf32>
    %78 = arith.truncf %77 : vector<8x128xf32> to vector<8x128xbf16>
    %c0_27 = arith.constant 0 : index
    %c0_28 = arith.constant 0 : index
    %79 = vector.load %arg7[%c0_27, %c0_28] : memref<128x128xbf16, #tpu.memory_space<vmem>>, vector<128x128xbf16>
    %cst_29 = arith.constant dense<0.000000e+00> : vector<8x128xf32>
    %80 = tpu.matmul %78, %79, %cst_29 {dimension_numbers = #tpu.dot_dimension_numbers<[1], [0], [0], [1], [0, 0, 1, 1], [], []>} : vector<8x128xbf16>, vector<128x128xbf16>, vector<8x128xf32> -> vector<8x128xf32>
    %c0_30 = arith.constant 0 : index
    %c0_31 = arith.constant 0 : index
    %81 = vector.load %arg8[%c0_30, %c0_31] : memref<1x128xf32, #tpu.memory_space<vmem>>, vector<1x128xf32>
    %82 = vector.broadcast %81 : vector<1x128xf32> to vector<8x128xf32>
    %83 = arith.addf %80, %82 : vector<8x128xf32>
    %cst_32 = arith.constant dense<0xFF800000> : vector<8xf32>
    %84 = vector.multi_reduction <maximumf>, %83, %cst_32 [1] : vector<8x128xf32> to vector<8xf32>
    %85 = vector.shape_cast %84 : vector<8xf32> to vector<8x1xf32>
    %86 = vector.broadcast %85 : vector<8x1xf32> to vector<8x128xf32>
    %87 = arith.subf %83, %86 : vector<8x128xf32>
    %88 = math.exp %87 : vector<8x128xf32>
    %cst_33 = arith.constant dense<0.000000e+00> : vector<8xf32>
    %89 = vector.multi_reduction <add>, %88, %cst_33 [1] : vector<8x128xf32> to vector<8xf32>
    %90 = vector.shape_cast %89 : vector<8xf32> to vector<8x1xf32>
    %91 = vector.broadcast %90 : vector<8x1xf32> to vector<8x128xf32>
    %92 = arith.divf %88, %91 : vector<8x128xf32>
    %c0_34 = arith.constant 0 : index
    %c0_35 = arith.constant 0 : index
    %93 = vector.load %arg9[%c0_34, %c0_35] : memref<8x128xf32, #tpu.memory_space<vmem>>, vector<8x128xf32>
    tpu.vector_store %arg9[%c0_34, %c0_35], %92 {strides = array<i32>} : memref<8x128xf32, #tpu.memory_space<vmem>>, vector<8x128xf32>,
    return
  }
  func.func @transform_0(%arg0: i32) -> i32 {
    %c0_i32 = arith.constant 0 : i32
    %c0_i32_0 = arith.constant 0 : i32
    return %c0_i32 : i32
  }
  func.func @transform_1(%arg0: i32) -> (i32, i32) {
    %c0_i32 = arith.constant 0 : i32
    %c0_i32_0 = arith.constant 0 : i32
    return %arg0, %c0_i32 : i32, i32
  }
  func.func @transform_2(%arg0: i32) -> (i32, i32) {
    %c0_i32 = arith.constant 0 : i32
    %c0_i32_0 = arith.constant 0 : i32
    %c0_i32_1 = arith.constant 0 : i32
    return %c0_i32, %c0_i32_0 : i32, i32
  }
  func.func @transform_3(%arg0: i32) -> (i32, i32) {
    %c0_i32 = arith.constant 0 : i32
    %c0_i32_0 = arith.constant 0 : i32
    %c0_i32_1 = arith.constant 0 : i32
    return %c0_i32, %c0_i32_0 : i32, i32
  }
  func.func @transform_4(%arg0: i32) -> (i32, i32) {
    %c0_i32 = arith.constant 0 : i32
    %c0_i32_0 = arith.constant 0 : i32
    %c0_i32_1 = arith.constant 0 : i32
    return %c0_i32, %c0_i32_0 : i32, i32
  }
  func.func @transform_5(%arg0: i32) -> (i32, i32) {
    %c0_i32 = arith.constant 0 : i32
    %c0_i32_0 = arith.constant 0 : i32
    %c0_i32_1 = arith.constant 0 : i32
    return %c0_i32, %c0_i32_0 : i32, i32
  }
  func.func @transform_6(%arg0: i32) -> (i32, i32) {
    %c0_i32 = arith.constant 0 : i32
    %c0_i32_0 = arith.constant 0 : i32
    %c0_i32_1 = arith.constant 0 : i32
    return %c0_i32, %c0_i32_0 : i32, i32
  }
  func.func @transform_7(%arg0: i32) -> (i32, i32) {
    %c0_i32 = arith.constant 0 : i32
    %c0_i32_0 = arith.constant 0 : i32
    %c0_i32_1 = arith.constant 0 : i32
    return %c0_i32, %c0_i32_0 : i32, i32
  }
  func.func @transform_8(%arg0: i32) -> (i32, i32) {
    %c0_i32 = arith.constant 0 : i32
    %c0_i32_0 = arith.constant 0 : i32
    return %arg0, %c0_i32 : i32, i32
  }
}

</mosaic_0001>

<llo_original>
// kernel: tpu_custom_call.1
$region0: #{tpu_custom_call.1}
  #allocation0 [shape = 'u32[]', space=smem, size = 0x4, offset = 0x4, fixed_abs, tag = 'smem constant byte address 0x4 - core index']
  #allocation1 [shape = 'u32[144,128]{1,0:T(1,128)}', space=vmem, size = 0x12000, scoped, tag = 'internal scratch']
  #allocation2 [shape = 's32[1]{0:T(128)S(6)}', space=smem, size = 0x200, scoped, tag = 'scoped memory for tpu_custom_call.1']
  %s0 = inlined_call_operand.<no memory space> [shape: s32[1], index: 0, kind: input, shape index: {}]
  %s1 = inlined_call_operand.hbm [shape: bf16[8,128], index: 1, kind: input, shape index: {}]
  %s2 = inlined_call_operand.hbm [shape: bf16[128,128], index: 2, kind: input, shape index: {}]
  %s3 = inlined_call_operand.vmem [shape: f32[1,128], index: 3, kind: input, shape index: {}]
  %s4 = inlined_call_operand.hbm [shape: bf16[128,128], index: 4, kind: input, shape index: {}]
  %s5 = inlined_call_operand.vmem [shape: f32[1,128], index: 5, kind: input, shape index: {}]
  %s6 = inlined_call_operand.hbm [shape: bf16[128,128], index: 6, kind: input, shape index: {}]
  %s7 = inlined_call_operand.vmem [shape: f32[1,128], index: 7, kind: input, shape index: {}]
  %s8 = inlined_call_operand.hbm [shape: f32[8,128], index: 8, kind: output, shape index: {}]
  %s9 = sld [smem:[#allocation0]]
  $region58: #{tpu_custom_call.1} parent=0
    _
  %s11 = ssub.s32 1, %s9
  %s12 = scalar_select 0, %s11, %s9
  %13 = sst [smem:[#allocation2]] %s0
  $region1: #{tpu_custom_call.1} parent=0
    #allocation3 [shape = 'u8[2048]{0}', space=vmem, size = 0x800, scoped, tag = 'input window, operand 1, single buffered']
    #allocation4 [shape = 's32[1]{0}', space=sflag, size = 0x4, scoped, tag = 'scoped memory for tpu_custom_call.1']
    #allocation5 [shape = 's32[1]{0}', space=sflag, size = 0x4, scoped, tag = 'scoped memory for tpu_custom_call.1']
    #allocation6 [shape = 'u8[32768]{0}', space=vmem, size = 0x8000, scoped, tag = 'input window, operand 2, single buffered']
    #allocation7 [shape = 's32[1]{0}', space=sflag, size = 0x4, scoped, tag = 'scoped memory for tpu_custom_call.1']
    #allocation8 [shape = 'u8[32768]{0}', space=vmem, size = 0x8000, scoped, tag = 'input window, operand 4, single buffered']
    #allocation9 [shape = 'u8[32768]{0}', space=vmem, size = 0x8000, scoped, tag = 'input window, operand 6, single buffered']
    #allocation10 [shape = 's32[1]{0}', space=sflag, size = 0x4, scoped, tag = 'scoped memory for tpu_custom_call.1']
    #allocation11 [shape = 'u8[4096]{0}', space=vmem, size = 0x1000, scoped, tag = 'output window, operand 0, single buffered']
    %14 = vsyncpa [#allocation4], 0
    %15 = vsyncpa [#allocation7], 0
    %16 = vsyncpa [#allocation10], 0
    %17 = vsyncpa [#allocation5], 0
    // Predicated region
    $region2: #{tpu_custom_call.1} parent=1 // pred_check
      _
    $region3: #{tpu_custom_call.1} parent=1 // pred_check_branch
      %19 = sbr.rel (0) target = $region5
    $region4: #{tpu_custom_call.1} parent=1 // pred_region
      _
    $region5: #{tpu_custom_call.1} parent=1 // pred_fallthru
      _
    // Predicated region
    $region6: #{tpu_custom_call.1} parent=1 // pred_check
      _
    $region7: #{tpu_custom_call.1} parent=1 // pred_check_branch
      %21 = sbr.rel (0) target = $region9
    $region8: #{tpu_custom_call.1} parent=1 // pred_region
      %s23 = ssub.s32 64, 64
      %24 = vsyncadd [#allocation4], %s23
      %s26 = sshll.u32 [#allocation3], 4
      %s27 = int_to_ptr.vmem [resolvable:$true] %s26
      %29 = dma.hbm_to_vmem [thread:$0]  %s1, 64, %s27, [#allocation4]
    $region9: #{tpu_custom_call.1} parent=1 // pred_fallthru
      _
    // Predicated region
    $region10: #{tpu_custom_call.1} parent=1 // pred_check
      _
    $region11: #{tpu_custom_call.1} parent=1 // pred_check_branch
      %31 = sbr.rel (0) target = $region13
    $region12: #{tpu_custom_call.1} parent=1 // pred_region
      %s33 = ssub.s32 1024, 1024
      %34 = vsyncadd [#allocation7], %s33
      %s35 = sshll.u32 [#allocation6], 4
      %s36 = int_to_ptr.vmem [resolvable:$true] %s35
      %41 = dma.hbm_to_vmem [thread:$0]  %s2, 1024, %s36, [#allocation7], 64, 64, 4
    $region13: #{tpu_custom_call.1} parent=1 // pred_fallthru
      _
    // Predicated region
    $region14: #{tpu_custom_call.1} parent=1 // pred_check
      _
    $region15: #{tpu_custom_call.1} parent=1 // pred_check_branch
      %43 = sbr.rel (0) target = $region17
    $region16: #{tpu_custom_call.1} parent=1 // pred_region
      _
    $region17: #{tpu_custom_call.1} parent=1 // pred_fallthru
      _
    // Predicated region
    $region18: #{tpu_custom_call.1} parent=1 // pred_check
      _
    $region19: #{tpu_custom_call.1} parent=1 // pred_check_branch
      %45 = sbr.rel (0) target = $region21
    $region20: #{tpu_custom_call.1} parent=1 // pred_region
      %s47 = ssub.s32 1024, 1024
      %48 = vsyncadd [#allocation7], %s47
      %s49 = sshll.u32 [#allocation8], 4
      %s50 = int_to_ptr.vmem [resolvable:$true] %s49
      %55 = dma.hbm_to_vmem [thread:$0]  %s4, 1024, %s50, [#allocation7], 64, 64, 4
    $region21: #{tpu_custom_call.1} parent=1 // pred_fallthru
      _
    // Predicated region
    $region22: #{tpu_custom_call.1} parent=1 // pred_check
      _
    $region23: #{tpu_custom_call.1} parent=1 // pred_check_branch
      %57 = sbr.rel (0) target = $region25
    $region24: #{tpu_custom_call.1} parent=1 // pred_region
      _
    $region25: #{tpu_custom_call.1} parent=1 // pred_fallthru
      _
    // Predicated region
    $region26: #{tpu_custom_call.1} parent=1 // pred_check
      _
    $region27: #{tpu_custom_call.1} parent=1 // pred_check_branch
      %59 = sbr.rel (0) target = $region29
    $region28: #{tpu_custom_call.1} parent=1 // pred_region
      %s61 = ssub.s32 1024, 1024
      %62 = vsyncadd [#allocation10], %s61
      %s63 = sshll.u32 [#allocation9], 4
      %s64 = int_to_ptr.vmem [resolvable:$true] %s63
      %69 = dma.hbm_to_vmem [thread:$0]  %s6, 1024, %s64, [#allocation10], 64, 64, 4
    $region29: #{tpu_custom_call.1} parent=1 // pred_fallthru
      _
    // Predicated region
    $region30: #{tpu_custom_call.1} parent=1 // pred_check
      _
    $region31: #{tpu_custom_call.1} parent=1 // pred_check_branch
      %71 = sbr.rel (0) target = $region33
    $region32: #{tpu_custom_call.1} parent=1 // pred_region
      _
    $region33: #{tpu_custom_call.1} parent=1 // pred_fallthru
      _
    // Predicated region
    $region34: #{tpu_custom_call.1} parent=1 // pred_check
      _
    $region35: #{tpu_custom_call.1} parent=1 // pred_check_branch
      %73 = sbr.rel (0) target = $region37
    $region36: #{tpu_custom_call.1} parent=1 // pred_region
      %74 = dma.done [#allocation4], 64
    $region37: #{tpu_custom_call.1} parent=1 // pred_fallthru
      _
    // Predicated region
    $region38: #{tpu_custom_call.1} parent=1 // pred_check
      _
    $region39: #{tpu_custom_call.1} parent=1 // pred_check_branch
      %76 = sbr.rel (0) target = $region41
    $region40: #{tpu_custom_call.1} parent=1 // pred_region
      %77 = dma.done [#allocation7], 1024
    $region41: #{tpu_custom_call.1} parent=1 // pred_fallthru
      _
    // Predicated region
    $region42: #{tpu_custom_call.1} parent=1 // pred_check
      _
    $region43: #{tpu_custom_call.1} parent=1 // pred_check_branch
      %79 = sbr.rel (0) target = $region45
    $region44: #{tpu_custom_call.1} parent=1 // pred_region
      %80 = dma.done [#allocation7], 1024
    $region45: #{tpu_custom_call.1} parent=1 // pred_fallthru
      _
    // Predicated region
    $region46: #{tpu_custom_call.1} parent=1 // pred_check
      _
    $region47: #{tpu_custom_call.1} parent=1 // pred_check_branch
      %82 = sbr.rel (0) target = $region49
    $region48: #{tpu_custom_call.1} parent=1 // pred_region
      %83 = dma.done [#allocation10], 1024
    $region49: #{tpu_custom_call.1} parent=1 // pred_fallthru
      _
    %v85 = vld [vmem:[#allocation3] sm:$0xf]
    %v86 = vld [vmem:[#allocation6] sm:$0xf]
    %v87 = vld [vmem:[#allocation6 + $0x4] sm:$0xf]
    %v88 = vld [vmem:[#allocation6 + $0x8] sm:$0xf]
    %v89 = vld [vmem:[#allocation6 + $0xc] sm:$0xf]
    %v90 = vld [vmem:[#allocation6 + $0x10] sm:$0xf]
    %v91 = vld [vmem:[#allocation6 + $0x14] sm:$0xf]
    %v92 = vld [vmem:[#allocation6 + $0x18] sm:$0xf]
    %v93 = vld [vmem:[#allocation6 + $0x1c] sm:$0xf]
    %v94 = vld [vmem:[#allocation6 + $0x20] sm:$0xf]
    %v95 = vld [vmem:[#allocation6 + $0x24] sm:$0xf]
    %v96 = vld [vmem:[#allocation6 + $0x28] sm:$0xf]
    %v97 = vld [vmem:[#allocation6 + $0x2c] sm:$0xf]
    %v98 = vld [vmem:[#allocation6 + $0x30] sm:$0xf]
    %v99 = vld [vmem:[#allocation6 + $0x34] sm:$0xf]
    %v100 = vld [vmem:[#allocation6 + $0x38] sm:$0xf]
    %v101 = vld [vmem:[#allocation6 + $0x3c] sm:$0xf]
    %v102 = vld [vmem:[%s3] sm:$0x1]
    %v104 = vlaneseq
    %v105 = vshrl.u32 %v104, 7
    %v106 = vsub.s32 0, %v105
    %v107 = vrot.slane %v102, %v106
    %v125 = vunpack.c.l.b16 %v86
    %v126 = vunpack.c.l.b16 %v87
    %v127 = vunpack.c.l.b16 %v88
    %v128 = vunpack.c.l.b16 %v89
    %v129 = vunpack.c.l.b16 %v90
    %v130 = vunpack.c.l.b16 %v91
    %v131 = vunpack.c.l.b16 %v92
    %v132 = vunpack.c.l.b16 %v93
    %v133 = vunpack.c.l.b16 %v94
    %v134 = vunpack.c.l.b16 %v95
    %v135 = vunpack.c.l.b16 %v96
    %v136 = vunpack.c.l.b16 %v97
    %v137 = vunpack.c.l.b16 %v98
    %v138 = vunpack.c.l.b16 %v99
    %v139 = vunpack.c.l.b16 %v100
    %v140 = vunpack.c.l.b16 %v101
    %v141 = vpack.c.b16 %v126, %v125
    %v142 = vpack.c.b16 %v128, %v127
    %v143 = vpack.c.b16 %v130, %v129
    %v144 = vpack.c.b16 %v132, %v131
    %v145 = vpack.c.b16 %v134, %v133
    %v146 = vpack.c.b16 %v136, %v135
    %v147 = vpack.c.b16 %v138, %v137
    %v148 = vpack.c.b16 %v140, %v139
    %157 = vmatprep.subr.bf16.mxu0 0
    %158 = vmatpush1.bf16.msra.mxu0 %v148
    %159 = vmatprep.subr.bf16.mxu0 0
    %160 = vmatpush1.bf16.msra.mxu0 %v147
    %161 = vmatprep.subr.bf16.mxu0 0
    %162 = vmatpush1.bf16.msra.mxu0 %v146
    %163 = vmatprep.subr.bf16.mxu0 0
    %164 = vmatpush1.bf16.msra.mxu0 %v145
    %165 = vmatprep.subr.bf16.mxu0 0
    %166 = vmatpush1.bf16.msra.mxu0 %v144
    %167 = vmatprep.subr.bf16.mxu0 0
    %168 = vmatpush1.bf16.msra.mxu0 %v143
    %169 = vmatprep.subr.bf16.mxu0 0
    %170 = vmatpush1.bf16.msra.mxu0 %v142
    %171 = vmatprep.subr.bf16.mxu0 0
    %172 = vmatpush1.bf16.msra.mxu0 %v141
    %173 = vmatprep.subr.bf16.mxu0 0
    %174 = vmatpush2.bf16.msra.mxu0 0
    %175 = vmatprep.subr.bf16.mxu0 0
    %176 = vmatpush2.bf16.msra.mxu0 0
    %177 = vmatprep.subr.bf16.mxu0 0
    %178 = vmatpush2.bf16.msra.mxu0 0
    %179 = vmatprep.subr.bf16.mxu0 0
    %180 = vmatpush2.bf16.msra.mxu0 0
    %181 = vmatprep.subr.bf16.mxu0 0
    %182 = vmatpush2.bf16.msra.mxu0 0
    %183 = vmatprep.subr.bf16.mxu0 0
    %184 = vmatpush2.bf16.msra.mxu0 0
    %185 = vmatprep.subr.bf16.mxu0 0
    %186 = vmatpush2.bf16.msra.mxu0 0
    %187 = vmatprep.subr.bf16.mxu0 0
    %188 = vmatpush2.bf16.msra.mxu0 0
    %189 = vmatprep.mubr.bf16.mxu0 0
    %190 = vmatmul.mubr.bf16.gmra.mxu0 %v85
    %v191 = vpop.f32.mrf.mxu0
    %v192 = vadd.f32 %v107, %v191
    %v193 = vpop.f32.mrf.mxu0
    %v194 = vpop.f32.mrf.mxu0
    %v195 = vpop.f32.mrf.mxu0
    %196 = vdwg.mxu0
    %v197 = vmax.f32 %v192, 0.0
    %v198 = vlaneseq
    %v199 = vshrl.u32 %v198, 7
    %v200 = vlaneseq
    %v201 = vand.u32 %v200, 127
    %s202 = smul.u32 0, 8
    %v203 = vstv %s202
    %v204 = vadd.s32 %v199, %v203
    %v205 = vmul.u32 %v204, 128
    %v206 = vadd.s32 %v205, %v201
    %s207 = sld [smem:[#allocation2]]
    %s208 = sadd.s32 %s207, 608135816
    %v209 = vstv %s208
    %v210 = vxor.u32 %v206, %v209
    %v211 = vshrl.u32 %v210, 16
    %v212 = vxor.u32 %v210, %v211
    %v213 = vmul.u32 %v212, 2146121005
    %v214 = vshrl.u32 %v213, 15
    %v215 = vxor.u32 %v213, %v214
    %v216 = vmul.u32 %v215, 2221713035
    %v217 = vshrl.u32 %v216, 16
    %v218 = vxor.u32 %v216, %v217
    %vm219 = vcmp.ge.u32.totalorder %v218, 1073741824
    %v220 = vmul.f32 %v197, 1.3333334
    %v221 = vsel %vm219, %v220, 0.0
    %v222 = vpack.c.bf16 %v221, %v221
    %v223 = vld [vmem:[#allocation8] sm:$0xf]
    %v224 = vld [vmem:[#allocation8 + $0x4] sm:$0xf]
    %v225 = vld [vmem:[#allocation8 + $0x8] sm:$0xf]
    %v226 = vld [vmem:[#allocation8 + $0xc] sm:$0xf]
    %v227 = vld [vmem:[#allocation8 + $0x10] sm:$0xf]
    %v228 = vld [vmem:[#allocation8 + $0x14] sm:$0xf]
    %v229 = vld [vmem:[#allocation8 + $0x18] sm:$0xf]
    %v230 = vld [vmem:[#allocation8 + $0x1c] sm:$0xf]
    %v231 = vld [vmem:[#allocation8 + $0x20] sm:$0xf]
    %v232 = vld [vmem:[#allocation8 + $0x24] sm:$0xf]
    %v233 = vld [vmem:[#allocation8 + $0x28] sm:$0xf]
    %v234 = vld [vmem:[#allocation8 + $0x2c] sm:$0xf]
    %v235 = vld [vmem:[#allocation8 + $0x30] sm:$0xf]
    %v236 = vld [vmem:[#allocation8 + $0x34] sm:$0xf]
    %v237 = vld [vmem:[#allocation8 + $0x38] sm:$0xf]
    %v238 = vld [vmem:[#allocation8 + $0x3c] sm:$0xf]
    %v239 = vld [vmem:[%s5] sm:$0x1]
    %v241 = vlaneseq
    %v242 = vshrl.u32 %v241, 7
    %v243 = vsub.s32 0, %v242
    %v244 = vrot.slane %v239, %v243
    %v262 = vunpack.c.l.b16 %v223
    %v263 = vunpack.c.l.b16 %v224
    %v264 = vunpack.c.l.b16 %v225
    %v265 = vunpack.c.l.b16 %v226
    %v266 = vunpack.c.l.b16 %v227
    %v267 = vunpack.c.l.b16 %v228
    %v268 = vunpack.c.l.b16 %v229
    %v269 = vunpack.c.l.b16 %v230
    %v270 = vunpack.c.l.b16 %v231
    %v271 = vunpack.c.l.b16 %v232
    %v272 = vunpack.c.l.b16 %v233
    %v273 = vunpack.c.l.b16 %v234
    %v274 = vunpack.c.l.b16 %v235
    %v275 = vunpack.c.l.b16 %v236
    %v276 = vunpack.c.l.b16 %v237
    %v277 = vunpack.c.l.b16 %v238
    %v278 = vpack.c.b16 %v263, %v262
    %v279 = vpack.c.b16 %v265, %v264
    %v280 = vpack.c.b16 %v267, %v266
    %v281 = vpack.c.b16 %v269, %v268
    %v282 = vpack.c.b16 %v271, %v270
    %v283 = vpack.c.b16 %v273, %v272
    %v284 = vpack.c.b16 %v275, %v274
    %v285 = vpack.c.b16 %v277, %v276
    %294 = vmatprep.subr.bf16.mxu0 0
    %295 = vmatpush1.bf16.msra.mxu0 %v285
    %296 = vmatprep.subr.bf16.mxu0 0
    %297 = vmatpush1.bf16.msra.mxu0 %v284
    %298 = vmatprep.subr.bf16.mxu0 0
    %299 = vmatpush1.bf16.msra.mxu0 %v283
    %300 = vmatprep.subr.bf16.mxu0 0
    %301 = vmatpush1.bf16.msra.mxu0 %v282
    %302 = vmatprep.subr.bf16.mxu0 0
    %303 = vmatpush1.bf16.msra.mxu0 %v281
    %304 = vmatprep.subr.bf16.mxu0 0
    %305 = vmatpush1.bf16.msra.mxu0 %v280
    %306 = vmatprep.subr.bf16.mxu0 0
    %307 = vmatpush1.bf16.msra.mxu0 %v279
    %308 = vmatprep.subr.bf16.mxu0 0
    %309 = vmatpush1.bf16.msra.mxu0 %v278
    %310 = vmatprep.subr.bf16.mxu0 0
    %311 = vmatpush2.bf16.msra.mxu0 0
    %312 = vmatprep.subr.bf16.mxu0 0
    %313 = vmatpush2.bf16.msra.mxu0 0
    %314 = vmatprep.subr.bf16.mxu0 0
    %315 = vmatpush2.bf16.msra.mxu0 0
    %316 = vmatprep.subr.bf16.mxu0 0
    %317 = vmatpush2.bf16.msra.mxu0 0
    %318 = vmatprep.subr.bf16.mxu0 0
    %319 = vmatpush2.bf16.msra.mxu0 0
    %320 = vmatprep.subr.bf16.mxu0 0
    %321 = vmatpush2.bf16.msra.mxu0 0
    %322 = vmatprep.subr.bf16.mxu0 0
    %323 = vmatpush2.bf16.msra.mxu0 0
    %324 = vmatprep.subr.bf16.mxu0 0
    %325 = vmatpush2.bf16.msra.mxu0 0
    %326 = vmatprep.mubr.bf16.mxu0 0
    %327 = vmatmul.mubr.bf16.gmra.mxu0 %v222
    %v328 = vpop.f32.mrf.mxu0
    %v329 = vadd.f32 %v244, %v328
    %v330 = vpop.f32.mrf.mxu0
    %v331 = vpop.f32.mrf.mxu0
    %v332 = vpop.f32.mrf.mxu0
    %333 = vdwg.mxu0
    %v334 = vmax.f32 %v329, 0.0
    %s335 = sadd.s32 %s207, 2242054355
    %v336 = vstv %s335
    %v337 = vxor.u32 %v206, %v336
    %v338 = vshrl.u32 %v337, 16
    %v339 = vxor.u32 %v337, %v338
    %v340 = vmul.u32 %v339, 2146121005
    %v341 = vshrl.u32 %v340, 15
    %v342 = vxor.u32 %v340, %v341
    %v343 = vmul.u32 %v342, 2221713035
    %v344 = vshrl.u32 %v343, 16
    %v345 = vxor.u32 %v343, %v344
    %vm346 = vcmp.ge.u32.totalorder %v345, 1073741824
    %v347 = vmul.f32 %v334, 1.3333334
    %v348 = vsel %vm346, %v347, 0.0
    %v349 = vpack.c.bf16 %v348, %v348
    %v350 = vld [vmem:[#allocation9] sm:$0xf]
    %v351 = vld [vmem:[#allocation9 + $0x4] sm:$0xf]
    %v352 = vld [vmem:[#allocation9 + $0x8] sm:$0xf]
    %v353 = vld [vmem:[#allocation9 + $0xc] sm:$0xf]
    %v354 = vld [vmem:[#allocation9 + $0x10] sm:$0xf]
    %v355 = vld [vmem:[#allocation9 + $0x14] sm:$0xf]
    %v356 = vld [vmem:[#allocation9 + $0x18] sm:$0xf]
    %v357 = vld [vmem:[#allocation9 + $0x1c] sm:$0xf]
    %v358 = vld [vmem:[#allocation9 + $0x20] sm:$0xf]
    %v359 = vld [vmem:[#allocation9 + $0x24] sm:$0xf]
    %v360 = vld [vmem:[#allocation9 + $0x28] sm:$0xf]
    %v361 = vld [vmem:[#allocation9 + $0x2c] sm:$0xf]
    %v362 = vld [vmem:[#allocation9 + $0x30] sm:$0xf]
    %v363 = vld [vmem:[#allocation9 + $0x34] sm:$0xf]
    %v364 = vld [vmem:[#allocation9 + $0x38] sm:$0xf]
    %v365 = vld [vmem:[#allocation9 + $0x3c] sm:$0xf]
    %v366 = vld [vmem:[%s7] sm:$0x1]
    %v368 = vlaneseq
    %v369 = vshrl.u32 %v368, 7
    %v370 = vsub.s32 0, %v369
    %v371 = vrot.slane %v366, %v370
    %v389 = vunpack.c.l.b16 %v350
    %v390 = vunpack.c.l.b16 %v351
    %v391 = vunpack.c.l.b16 %v352
    %v392 = vunpack.c.l.b16 %v353
    %v393 = vunpack.c.l.b16 %v354
    %v394 = vunpack.c.l.b16 %v355
    %v395 = vunpack.c.l.b16 %v356
    %v396 = vunpack.c.l.b16 %v357
    %v397 = vunpack.c.l.b16 %v358
    %v398 = vunpack.c.l.b16 %v359
    %v399 = vunpack.c.l.b16 %v360
    %v400 = vunpack.c.l.b16 %v361
    %v401 = vunpack.c.l.b16 %v362
    %v402 = vunpack.c.l.b16 %v363
    %v403 = vunpack.c.l.b16 %v364
    %v404 = vunpack.c.l.b16 %v365
    %v405 = vpack.c.b16 %v390, %v389
    %v406 = vpack.c.b16 %v392, %v391
    %v407 = vpack.c.b16 %v394, %v393
    %v408 = vpack.c.b16 %v396, %v395
    %v409 = vpack.c.b16 %v398, %v397
    %v410 = vpack.c.b16 %v400, %v399
    %v411 = vpack.c.b16 %v402, %v401
    %v412 = vpack.c.b16 %v404, %v403
    %421 = vmatprep.subr.bf16.mxu0 0
    %422 = vmatpush1.bf16.msra.mxu0 %v412
    %423 = vmatprep.subr.bf16.mxu0 0
    %424 = vmatpush1.bf16.msra.mxu0 %v411
    %425 = vmatprep.subr.bf16.mxu0 0
    %426 = vmatpush1.bf16.msra.mxu0 %v410
    %427 = vmatprep.subr.bf16.mxu0 0
    %428 = vmatpush1.bf16.msra.mxu0 %v409
    %429 = vmatprep.subr.bf16.mxu0 0
    %430 = vmatpush1.bf16.msra.mxu0 %v408
    %431 = vmatprep.subr.bf16.mxu0 0
    %432 = vmatpush1.bf16.msra.mxu0 %v407
    %433 = vmatprep.subr.bf16.mxu0 0
    %434 = vmatpush1.bf16.msra.mxu0 %v406
    %435 = vmatprep.subr.bf16.mxu0 0
    %436 = vmatpush1.bf16.msra.mxu0 %v405
    %437 = vmatprep.subr.bf16.mxu0 0
    %438 = vmatpush2.bf16.msra.mxu0 0
    %439 = vmatprep.subr.bf16.mxu0 0
    %440 = vmatpush2.bf16.msra.mxu0 0
    %441 = vmatprep.subr.bf16.mxu0 0
    %442 = vmatpush2.bf16.msra.mxu0 0
    %443 = vmatprep.subr.bf16.mxu0 0
    %444 = vmatpush2.bf16.msra.mxu0 0
    %445 = vmatprep.subr.bf16.mxu0 0
    %446 = vmatpush2.bf16.msra.mxu0 0
    %447 = vmatprep.subr.bf16.mxu0 0
    %448 = vmatpush2.bf16.msra.mxu0 0
    %449 = vmatprep.subr.bf16.mxu0 0
    %450 = vmatpush2.bf16.msra.mxu0 0
    %451 = vmatprep.subr.bf16.mxu0 0
    %452 = vmatpush2.bf16.msra.mxu0 0
    %453 = vmatprep.mubr.bf16.mxu0 0
    %454 = vmatmul.mubr.bf16.gmra.mxu0 %v349
    %v455 = vpop.f32.mrf.mxu0
    %v456 = vadd.f32 %v371, %v455
    %v457 = vpop.f32.mrf.mxu0
    %v458 = vpop.f32.mrf.mxu0
    %v459 = vpop.f32.mrf.mxu0
    %460 = vdwg.mxu0
    %461 = vmax.xlane.f32.xlu0 %v456
    %v462 = vpop.xlane.xlu0 %461
    %v463 = vsub.f32 %v456, %v462
    %v464 = vmul.f32 %v463, 1.442695
    %v465 = vpow.pop %v464
    %466 = vadd.xlane.f32.xlu0 %v465
    %v467 = vpop.xlane.xlu0 %466
    %v468 = vrcp.pop %v467
    %v469 = vmul.f32 %v465, %v468
    %470 = vst [vmem:[#allocation11] sm:$0xff] %v469
    // Predicated region
    $region50: #{tpu_custom_call.1} parent=1 // pred_check
      _
    $region51: #{tpu_custom_call.1} parent=1 // pred_check_branch
      %472 = sbr.rel (0) target = $region53
    $region52: #{tpu_custom_call.1} parent=1 // pred_region
      %s474 = ssub.s32 128, 128
      %475 = vsyncadd [#allocation5], %s474
      %s477 = sshll.u32 [#allocation11], 4
      %s478 = int_to_ptr.vmem [resolvable:$true] %s477
      %480 = dma.vmem_to_hbm [thread:$0]  %s478, 128, %s8, [#allocation5]
    $region53: #{tpu_custom_call.1} parent=1 // pred_fallthru
      _
    // Predicated region
    $region54: #{tpu_custom_call.1} parent=1 // pred_check
      _
    $region55: #{tpu_custom_call.1} parent=1 // pred_check_branch
      %482 = sbr.rel (0) target = $region57
    $region56: #{tpu_custom_call.1} parent=1 // pred_region
      %483 = dma.done [#allocation5], 128
    $region57: #{tpu_custom_call.1} parent=1 // pred_fallthru
      _
    %484 = vsyncpa [#allocation4], 1
    %485 = vsyncpa [#allocation7], 1
    %486 = vsyncpa [#allocation10], 1
    %487 = vsyncpa [#allocation5], 1

</llo_original>
